<compile_context>
chip_gen: v7x
topology: tpu7x:2x2x1
jax: 0.10.0
libtpu: 0.0.40
codegen_flags: <defaults>
</compile_context>

<pallas_src>
import functools

import jax
import jax.numpy as jnp
from jax.experimental import pallas as pl
from jax.experimental.pallas import tpu as pltpu


def _round_up(x: int, m: int) -> int:
    return ((x + m - 1) // m) * m


def _mlp_forecast_kernel(x_ref, w1_ref, b1_ref, w2_ref, b2_ref, o_ref, acc_ref):
    """Fused two-layer MLP: o = relu(x @ W1 + b1) @ W2 + b2.

    Grid = (batch_tiles [parallel], k_tiles [arbitrary / reduction]).
    The first matmul is K-tiled and accumulated in f32 scratch; bias + ReLU and
    the second matmul run once on the last K step.
    """
    k = pl.program_id(1)

    @pl.when(k == 0)
    def _():
        acc_ref[...] = jnp.zeros_like(acc_ref)

    # Partial first matmul on the MXU (bf16 operands, f32 accumulation).
    acc_ref[...] += jnp.dot(x_ref[...], w1_ref[...],
                            preferred_element_type=jnp.float32)

    @pl.when(k == pl.num_programs(1) - 1)
    def _():
        # Bias add + ReLU kept in f32 vregs (v5e VPU has no bf16 path).
        h = jnp.maximum(acc_ref[...] + b1_ref[...], 0.0)
        # Second matmul: cast activations to bf16 for the MXU, accumulate f32.
        y = jnp.dot(h.astype(w2_ref.dtype), w2_ref[...],
                    preferred_element_type=jnp.float32)
        o_ref[...] = (y + b2_ref[...]).astype(o_ref.dtype)


@functools.partial(jax.jit, static_argnames=("tb_max", "tk_max"))
def mlp_forecast(x_seq, w1, b1, w2, b2, *, tb_max: int = 256, tk_max: int = 512):
    """
    x_seq: (batch, seq_len, input_size) float32
    w1:    (seq_len*input_size, hidden)  float32
    b1:    (hidden,)                     float32
    w2:    (hidden, prediction_length)   float32
    b2:    (prediction_length,)          float32
    returns: (batch, prediction_length)  float32
    """
    B, S, D = x_seq.shape
    F = S * D
    H = w1.shape[1]
    P = w2.shape[1]

    # ---- tile / padding choices (lane-dense: multiples of (8, 128)) --------
    TB = min(tb_max, _round_up(B, 8))
    B_pad = _round_up(B, TB)

    F_pad128 = _round_up(F, 128)
    if F_pad128 <= tk_max:
        TK, F_pad = F_pad128, F_pad128
    else:
        TK = tk_max                      # multiple of 128
        F_pad = _round_up(F, TK)

    H_pad = _round_up(H, 128)
    P_pad = _round_up(P, 128)

    # v7x VMEM re-derivation: keep the double-buffered footprint well under the
    # ~32 MiB scoped default (v7x has only 64 MiB physical VMEM).
    def _footprint(tb, tk):
        bf16, f32, dbl = 2, 4, 2
        return (dbl * (tb * tk * bf16 +        # x tile
                       tk * H_pad * bf16 +     # W1 tile
                       H_pad * P_pad * bf16 +  # W2 (resident)
                       H_pad * f32 + P_pad * f32 +
                       tb * P_pad * f32)       # out tile
                + tb * H_pad * f32)            # accumulator scratch
    budget = 24 * 1024 * 1024
    while (_footprint(TB, TK) > budget and TK > 128
           and (TK // 2) % 128 == 0 and F_pad % (TK // 2) == 0):
        TK //= 2
    while _footprint(TB, TK) > budget and TB > 8:
        TB //= 2
        B_pad = _round_up(B, TB)

    # ---- host-side glue: flatten, zero-pad, bf16 weight/activation copies ---
    x_flat = x_seq.reshape(B, F).astype(jnp.float32)
    x_p = jnp.pad(x_flat, ((0, B_pad - B), (0, F_pad - F))).astype(jnp.bfloat16)
    w1_p = jnp.pad(w1, ((0, F_pad - F), (0, H_pad - H))).astype(jnp.bfloat16)
    w2_p = jnp.pad(w2, ((0, H_pad - H), (0, P_pad - P))).astype(jnp.bfloat16)
    b1_p = jnp.pad(b1, (0, H_pad - H)).reshape(1, H_pad).astype(jnp.float32)
    b2_p = jnp.pad(b2, (0, P_pad - P)).reshape(1, P_pad).astype(jnp.float32)

    grid = (B_pad // TB, F_pad // TK)

    cost = pl.CostEstimate(
        flops=2 * B_pad * (F_pad * H_pad + H_pad * P_pad),
        transcendentals=0,
        bytes_accessed=(x_p.size * 2 + w1_p.size * 2 + w2_p.size * 2
                        + b1_p.size * 4 + b2_p.size * 4 + B_pad * P_pad * 4),
    )

    out = pl.pallas_call(
        _mlp_forecast_kernel,
        out_shape=jax.ShapeDtypeStruct((B_pad, P_pad), jnp.float32),
        grid_spec=pltpu.PrefetchScalarGridSpec(
            num_scalar_prefetch=0,
            grid=grid,
            in_specs=[
                pl.BlockSpec((TB, TK), lambda i, k: (i, k)),       # x tile
                pl.BlockSpec((TK, H_pad), lambda i, k: (k, 0)),    # W1 tile
                pl.BlockSpec((1, H_pad), lambda i, k: (0, 0)),     # b1 (resident)
                pl.BlockSpec((H_pad, P_pad), lambda i, k: (0, 0)), # W2 (resident)
                pl.BlockSpec((1, P_pad), lambda i, k: (0, 0)),     # b2 (resident)
            ],
            out_specs=pl.BlockSpec((TB, P_pad), lambda i, k: (i, 0)),
            scratch_shapes=[pltpu.VMEM((TB, H_pad), jnp.float32)],
        ),
        compiler_params=pltpu.CompilerParams(
            dimension_semantics=("parallel", "arbitrary"),
        ),
        cost_estimate=cost,
    )(x_p, w1_p, b1_p, w2_p, b2_p)

    # Strip batch / prediction-length padding (padded columns are exact zeros).
    return out[:B, :P]


def reference_forward(x_seq, w1, b1, w2, b2):
    """Pure-JAX f32 reference matching the PyTorch semantics."""
    B = x_seq.shape[0]
    x = x_seq.reshape(B, -1)
    h = jnp.maximum(x @ w1 + b1, 0.0)
    return h @ w2 + b2


if __name__ == "__main__":
    # Small shapes consistent with the forward contract:
    # sequence (batch, seq_len, input_size) -> output (batch, prediction_length)
    batch, seq_len, input_size = 2, 8, 4
    hidden = 32
    prediction_length = 4

    key = jax.random.PRNGKey(0)
    k_x, k_w1, k_b1, k_w2, k_b2 = jax.random.split(key, 5)

    x_seq = jax.random.normal(k_x, (batch, seq_len, input_size), jnp.float32)
    w1 = jax.random.normal(k_w1, (seq_len * input_size, hidden), jnp.float32) * 0.1
    b1 = jax.random.normal(k_b1, (hidden,), jnp.float32) * 0.1
    w2 = jax.random.normal(k_w2, (hidden, prediction_length), jnp.float32) * 0.1
    b2 = jax.random.normal(k_b2, (prediction_length,), jnp.float32) * 0.1

    out = mlp_forecast(x_seq, w1, b1, w2, b2)
    out = jax.block_until_ready(out)

    ref = reference_forward(x_seq, w1, b1, w2, b2)
    assert out.shape == (batch, prediction_length)
    # bf16 matmul operands with f32 accumulation -> relaxed tolerance.
    assert jnp.allclose(out, ref, atol=2e-2, rtol=2e-2), "mismatch vs reference"

    # TODO(synk): normalizer attach/denormalize, save/load, and the recursive
    # forecast() loop are host-side orchestration, not kernel compute.
    print("KERNEL_OK")
</pallas_src>

<mosaic_0001>
module attributes {stable_mosaic.version = 11 : i64} {
  func.func @_mlp_forecast_kernel(%arg0: i32, %arg1: i32, %arg2: memref<8x128xbf16, #tpu.memory_space<vmem>>, %arg3: memref<128x128xbf16, #tpu.memory_space<vmem>>, %arg4: memref<1x128xf32, #tpu.memory_space<vmem>>, %arg5: memref<128x128xbf16, #tpu.memory_space<vmem>>, %arg6: memref<1x128xf32, #tpu.memory_space<vmem>>, %arg7: memref<8x128xf32, #tpu.memory_space<vmem>>, %arg8: memref<8x128xf32, #tpu.memory_space<vmem>>) attributes {dimension_semantics = [#tpu.dimension_semantics<parallel>, #tpu.dimension_semantics<arbitrary>], iteration_bounds = array<i64: 1, 1>, scalar_prefetch = 0 : i64, scratch_operands = 1 : i64, tpu.core_type = #tpu.core_type<tc>, window_params = [{transform_indices = @transform_0, window_bounds = array<i64: 8, 128>}, {transform_indices = @transform_1, window_bounds = array<i64: 128, 128>}, {pipeline_mode = #tpu.pipeline_mode<synchronous>, transform_indices = @transform_2, window_bounds = array<i64: 1, 128>}, {pipeline_mode = #tpu.pipeline_mode<synchronous>, transform_indices = @transform_3, window_bounds = array<i64: 128, 128>}, {pipeline_mode = #tpu.pipeline_mode<synchronous>, transform_indices = @transform_4, window_bounds = array<i64: 1, 128>}, {transform_indices = @transform_5, window_bounds = array<i64: 8, 128>}]} {
    %c0_i32 = arith.constant 0 : i32
    %0 = arith.cmpi eq, %arg1, %c0_i32 : i32
    %1 = arith.extui %0 : i1 to i32
    %c0_i32_0 = arith.constant 0 : i32
    %2 = arith.cmpi ne, %1, %c0_i32_0 : i32
    scf.if %2 {
      %cst_10 = arith.constant 0.000000e+00 : f32
      %12 = vector.broadcast %cst_10 : f32 to vector<8x128xf32>
      %c0_11 = arith.constant 0 : index
      %c0_12 = arith.constant 0 : index
      %13 = vector.load %arg8[%c0_11, %c0_12] : memref<8x128xf32, #tpu.memory_space<vmem>>, vector<8x128xf32>
      tpu.vector_store %arg8[%c0_11, %c0_12], %12 {strides = array<i32>} : memref<8x128xf32, #tpu.memory_space<vmem>>, vector<8x128xf32>,
    } else {
    }
    %c0 = arith.constant 0 : index
    %c0_1 = arith.constant 0 : index
    %3 = vector.load %arg8[%c0, %c0_1] : memref<8x128xf32, #tpu.memory_space<vmem>>, vector<8x128xf32>
    %c0_2 = arith.constant 0 : index
    %c0_3 = arith.constant 0 : index
    %4 = vector.load %arg2[%c0_2, %c0_3] : memref<8x128xbf16, #tpu.memory_space<vmem>>, vector<8x128xbf16>
    %c0_4 = arith.constant 0 : index
    %c0_5 = arith.constant 0 : index
    %5 = vector.load %arg3[%c0_4, %c0_5] : memref<128x128xbf16, #tpu.memory_space<vmem>>, vector<128x128xbf16>
    %cst = arith.constant dense<0.000000e+00> : vector<8x128xf32>
    %6 = tpu.matmul %4, %5, %cst {dimension_numbers = #tpu.dot_dimension_numbers<[1], [0], [0], [1], [0, 0, 1, 1], [], []>} : vector<8x128xbf16>, vector<128x128xbf16>, vector<8x128xf32> -> vector<8x128xf32>
    %7 = arith.addf %3, %6 : vector<8x128xf32>
    %c0_6 = arith.constant 0 : index
    %c0_7 = arith.constant 0 : index
    %8 = vector.load %arg8[%c0_6, %c0_7] : memref<8x128xf32, #tpu.memory_space<vmem>>, vector<8x128xf32>
    tpu.vector_store %arg8[%c0_6, %c0_7], %7 {strides = array<i32>} : memref<8x128xf32, #tpu.memory_space<vmem>>, vector<8x128xf32>,
    %c0_i32_8 = arith.constant 0 : i32
    %9 = arith.cmpi eq, %arg1, %c0_i32_8 : i32
    %10 = arith.extui %9 : i1 to i32
    %c0_i32_9 = arith.constant 0 : i32
    %11 = arith.cmpi ne, %10, %c0_i32_9 : i32
    scf.if %11 {
      %c0_10 = arith.constant 0 : index
      %c0_11 = arith.constant 0 : index
      %12 = vector.load %arg8[%c0_10, %c0_11] : memref<8x128xf32, #tpu.memory_space<vmem>>, vector<8x128xf32>
      %c0_12 = arith.constant 0 : index
      %c0_13 = arith.constant 0 : index
      %13 = vector.load %arg4[%c0_12, %c0_13] : memref<1x128xf32, #tpu.memory_space<vmem>>, vector<1x128xf32>
      %14 = vector.broadcast %13 : vector<1x128xf32> to vector<8x128xf32>
      %15 = arith.addf %12, %14 : vector<8x128xf32>
      %cst_14 = arith.constant 0.000000e+00 : f32
      %16 = vector.broadcast %cst_14 : f32 to vector<8x128xf32>
      %17 = arith.maximumf %15, %16 : vector<8x128xf32>
      %18 = arith.truncf %17 : vector<8x128xf32> to vector<8x128xbf16>
      %c0_15 = arith.constant 0 : index
      %c0_16 = arith.constant 0 : index
      %19 = vector.load %arg5[%c0_15, %c0_16] : memref<128x128xbf16, #tpu.memory_space<vmem>>, vector<128x128xbf16>
      %cst_17 = arith.constant dense<0.000000e+00> : vector<8x128xf32>
      %20 = tpu.matmul %18, %19, %cst_17 {dimension_numbers = #tpu.dot_dimension_numbers<[1], [0], [0], [1], [0, 0, 1, 1], [], []>} : vector<8x128xbf16>, vector<128x128xbf16>, vector<8x128xf32> -> vector<8x128xf32>
      %c0_18 = arith.constant 0 : index
      %c0_19 = arith.constant 0 : index
      %21 = vector.load %arg6[%c0_18, %c0_19] : memref<1x128xf32, #tpu.memory_space<vmem>>, vector<1x128xf32>
      %22 = vector.broadcast %21 : vector<1x128xf32> to vector<8x128xf32>
      %23 = arith.addf %20, %22 : vector<8x128xf32>
      %c0_20 = arith.constant 0 : index
      %c0_21 = arith.constant 0 : index
      %24 = vector.load %arg7[%c0_20, %c0_21] : memref<8x128xf32, #tpu.memory_space<vmem>>, vector<8x128xf32>
      tpu.vector_store %arg7[%c0_20, %c0_21], %23 {strides = array<i32>} : memref<8x128xf32, #tpu.memory_space<vmem>>, vector<8x128xf32>,
    } else {
    }
    return
  }
  func.func @transform_0(%arg0: i32, %arg1: i32) -> (i32, i32) {
    %c0_i32 = arith.constant 0 : i32
    return %arg0, %arg1 : i32, i32
  }
  func.func @transform_1(%arg0: i32, %arg1: i32) -> (i32, i32) {
    %c0_i32 = arith.constant 0 : i32
    %c0_i32_0 = arith.constant 0 : i32
    return %arg1, %c0_i32 : i32, i32
  }
  func.func @transform_2(%arg0: i32, %arg1: i32) -> (i32, i32) {
    %c0_i32 = arith.constant 0 : i32
    %c0_i32_0 = arith.constant 0 : i32
    %c0_i32_1 = arith.constant 0 : i32
    return %c0_i32, %c0_i32_0 : i32, i32
  }
  func.func @transform_3(%arg0: i32, %arg1: i32) -> (i32, i32) {
    %c0_i32 = arith.constant 0 : i32
    %c0_i32_0 = arith.constant 0 : i32
    %c0_i32_1 = arith.constant 0 : i32
    return %c0_i32, %c0_i32_0 : i32, i32
  }
  func.func @transform_4(%arg0: i32, %arg1: i32) -> (i32, i32) {
    %c0_i32 = arith.constant 0 : i32
    %c0_i32_0 = arith.constant 0 : i32
    %c0_i32_1 = arith.constant 0 : i32
    return %c0_i32, %c0_i32_0 : i32, i32
  }
  func.func @transform_5(%arg0: i32, %arg1: i32) -> (i32, i32) {
    %c0_i32 = arith.constant 0 : i32
    %c0_i32_0 = arith.constant 0 : i32
    return %arg0, %c0_i32 : i32, i32
  }
}

</mosaic_0001>

<llo_original>
// kernel: mlp_forecast.1
$region0: #{mlp_forecast.1}
  #allocation0 [shape = 'u32[]', space=smem, size = 0x4, offset = 0x4, fixed_abs, tag = 'smem constant byte address 0x4 - core index']
  #allocation1 [shape = 'u32[144,128]{1,0:T(1,128)}', space=vmem, size = 0x12000, scoped, tag = 'internal scratch']
  #allocation2 [shape = 'f32[8,128]{1,0:T(8,128)}', space=vmem, size = 0x1000, scoped, tag = 'scratch operand']
  %s0 = inlined_call_operand.vmem [shape: bf16[8,128], index: 0, kind: input, shape index: {}]
  %s1 = inlined_call_operand.vmem [shape: bf16[128,128], index: 1, kind: input, shape index: {}]
  %s2 = inlined_call_operand.vmem [shape: f32[1,128], index: 2, kind: input, shape index: {}]
  %s3 = inlined_call_operand.vmem [shape: bf16[128,128], index: 3, kind: input, shape index: {}]
  %s4 = inlined_call_operand.vmem [shape: f32[1,128], index: 4, kind: input, shape index: {}]
  %s5 = inlined_call_operand.vmem [shape: f32[8,128], index: 5, kind: output, shape index: {}]
  %s6 = sld [smem:[#allocation0]]
  $region38: #{mlp_forecast.1} parent=0
    _
  %s8 = ssub.s32 1, %s6
  %s9 = scalar_select 0, %s8, %s6
  // Predicated region
  $region2: #{mlp_forecast.1} parent=0 // pred_check
    _
  $region3: #{mlp_forecast.1} parent=0 // pred_check_branch
    %11 = sbr.rel (0) target = $region5
  $region4: #{mlp_forecast.1} parent=0 // pred_region
    _
  $region5: #{mlp_forecast.1} parent=0 // pred_fallthru
    _
  // Predicated region
  $region6: #{mlp_forecast.1} parent=0 // pred_check
    _
  $region7: #{mlp_forecast.1} parent=0 // pred_check_branch
    %13 = sbr.rel (0) target = $region9
  $region8: #{mlp_forecast.1} parent=0 // pred_region
    _
  $region9: #{mlp_forecast.1} parent=0 // pred_fallthru
    _
  // Predicated region
  $region10: #{mlp_forecast.1} parent=0 // pred_check
    _
  $region11: #{mlp_forecast.1} parent=0 // pred_check_branch
    %15 = sbr.rel (0) target = $region13
  $region12: #{mlp_forecast.1} parent=0 // pred_region
    _
  $region13: #{mlp_forecast.1} parent=0 // pred_fallthru
    _
  // Predicated region
  $region14: #{mlp_forecast.1} parent=0 // pred_check
    _
  $region15: #{mlp_forecast.1} parent=0 // pred_check_branch
    %17 = sbr.rel (0) target = $region17
  $region16: #{mlp_forecast.1} parent=0 // pred_region
    _
  $region17: #{mlp_forecast.1} parent=0 // pred_fallthru
    _
  // Predicated region
  $region18: #{mlp_forecast.1} parent=0 // pred_check
    _
  $region19: #{mlp_forecast.1} parent=0 // pred_check_branch
    %19 = sbr.rel (0) target = $region21
  $region20: #{mlp_forecast.1} parent=0 // pred_region
    _
  $region21: #{mlp_forecast.1} parent=0 // pred_fallthru
    _
  %p21 = scmp.eq.s32.totalorder 0, 0
  // Predicated region
  $region22: #{mlp_forecast.1} parent=0 // pred_check
    %p22 = pneg %p21
  $region23: #{mlp_forecast.1} parent=0 // pred_check_branch
    %24 = sbr.rel (%p22) target = $region25
  $region24: #{mlp_forecast.1} parent=0 // pred_region
    %25 = vst [vmem:[#allocation2] sm:$0xff] 0.0
  $region25: #{mlp_forecast.1} parent=0 // pred_fallthru
    _
  %v26 = vld [vmem:[#allocation2] sm:$0xff]
  %v27 = vld [vmem:[%s0] sm:$0xf]
  %v28 = vld [vmem:[%s1] sm:$0xf]
  %v29 = vld [vmem:[%s1 + $0x4] sm:$0xf]
  %v30 = vld [vmem:[%s1 + $0x8] sm:$0xf]
  %v31 = vld [vmem:[%s1 + $0xc] sm:$0xf]
  %v32 = vld [vmem:[%s1 + $0x10] sm:$0xf]
  %v33 = vld [vmem:[%s1 + $0x14] sm:$0xf]
  %v34 = vld [vmem:[%s1 + $0x18] sm:$0xf]
  %v35 = vld [vmem:[%s1 + $0x1c] sm:$0xf]
  %v36 = vld [vmem:[%s1 + $0x20] sm:$0xf]
  %v37 = vld [vmem:[%s1 + $0x24] sm:$0xf]
  %v38 = vld [vmem:[%s1 + $0x28] sm:$0xf]
  %v39 = vld [vmem:[%s1 + $0x2c] sm:$0xf]
  %v40 = vld [vmem:[%s1 + $0x30] sm:$0xf]
  %v41 = vld [vmem:[%s1 + $0x34] sm:$0xf]
  %v42 = vld [vmem:[%s1 + $0x38] sm:$0xf]
  %v43 = vld [vmem:[%s1 + $0x3c] sm:$0xf]
  %v60 = vunpack.c.l.b16 %v28
  %v61 = vunpack.c.l.b16 %v29
  %v62 = vunpack.c.l.b16 %v30
  %v63 = vunpack.c.l.b16 %v31
  %v64 = vunpack.c.l.b16 %v32
  %v65 = vunpack.c.l.b16 %v33
  %v66 = vunpack.c.l.b16 %v34
  %v67 = vunpack.c.l.b16 %v35
  %v68 = vunpack.c.l.b16 %v36
  %v69 = vunpack.c.l.b16 %v37
  %v70 = vunpack.c.l.b16 %v38
  %v71 = vunpack.c.l.b16 %v39
  %v72 = vunpack.c.l.b16 %v40
  %v73 = vunpack.c.l.b16 %v41
  %v74 = vunpack.c.l.b16 %v42
  %v75 = vunpack.c.l.b16 %v43
  %v76 = vpack.c.b16 %v61, %v60
  %v77 = vpack.c.b16 %v63, %v62
  %v78 = vpack.c.b16 %v65, %v64
  %v79 = vpack.c.b16 %v67, %v66
  %v80 = vpack.c.b16 %v69, %v68
  %v81 = vpack.c.b16 %v71, %v70
  %v82 = vpack.c.b16 %v73, %v72
  %v83 = vpack.c.b16 %v75, %v74
  %92 = vmatprep.subr.bf16.mxu0 0
  %93 = vmatpush1.bf16.msra.mxu0 %v76
  %94 = vmatprep.subr.bf16.mxu0 0
  %95 = vmatpush1.bf16.msra.mxu0 %v77
  %96 = vmatprep.subr.bf16.mxu0 0
  %97 = vmatpush1.bf16.msra.mxu0 %v78
  %98 = vmatprep.subr.bf16.mxu0 0
  %99 = vmatpush1.bf16.msra.mxu0 %v79
  %100 = vmatprep.subr.bf16.mxu0 0
  %101 = vmatpush1.bf16.msra.mxu0 %v80
  %102 = vmatprep.subr.bf16.mxu0 0
  %103 = vmatpush1.bf16.msra.mxu0 %v81
  %104 = vmatprep.subr.bf16.mxu0 0
  %105 = vmatpush1.bf16.msra.mxu0 %v82
  %106 = vmatprep.subr.bf16.mxu0 0
  %107 = vmatpush1.bf16.msra.mxu0 %v83
  %108 = vmatprep.subr.bf16.mxu0 0
  %109 = vmatpush1.bf16.msra.mxu0 0
  %110 = vmatprep.subr.bf16.mxu0 0
  %111 = vmatpush1.bf16.msra.mxu0 0
  %112 = vmatprep.subr.bf16.mxu0 0
  %113 = vmatpush1.bf16.msra.mxu0 0
  %114 = vmatprep.subr.bf16.mxu0 0
  %115 = vmatpush1.bf16.msra.mxu0 0
  %116 = vmatprep.subr.bf16.mxu0 0
  %117 = vmatpush1.bf16.msra.mxu0 0
  %118 = vmatprep.subr.bf16.mxu0 0
  %119 = vmatpush1.bf16.msra.mxu0 0
  %120 = vmatprep.subr.bf16.mxu0 0
  %121 = vmatpush1.bf16.msra.mxu0 0
  %122 = vmatprep.subr.bf16.mxu0 0
  %123 = vmatpush1.bf16.msra.mxu0 0
  %124 = vmatprep.mubr.bf16.mxu0 0
  %125 = vmatmul.mubr.bf16.gmra.mrb[0].mxu0 %v27
  %v126 = vpop.f32.mrb[0].mxu0
  %v127 = vadd.f32 0.0, %v126
  %v128 = vpop.f32.mrb[0].mxu0
  %v129 = vpop.f32.mrb[0].mxu0
  %v130 = vpop.f32.mrb[0].mxu0
  %131 = vdwg.mxu0
  %v132 = vadd.f32 %v26, %v127
  %133 = vst [vmem:[#allocation2] sm:$0xff] %v132
  // Predicated region
  $region26: #{mlp_forecast.1} parent=0 // pred_check
    %p134 = pneg %p21
  $region27: #{mlp_forecast.1} parent=0 // pred_check_branch
    %136 = sbr.rel (%p134) target = $region29
  $region28: #{mlp_forecast.1} parent=0 // pred_region
    %v137 = vld [vmem:[#allocation2] sm:$0xff]
    %v138 = vld [vmem:[%s2] sm:$0x1]
    %v140 = vlaneseq
    %v141 = vshrl.u32 %v140, 7
    %v142 = vsub.s32 0, %v141
    %v143 = vrot.slane %v138, %v142
    %v145 = vadd.f32 %v137, %v143
    %v146 = vmax.f32 %v145, 0.0
    %v147 = vpack.c.bf16 %v146, %v146
    %v148 = vld [vmem:[%s3] sm:$0xf]
    %v149 = vld [vmem:[%s3 + $0x4] sm:$0xf]
    %v150 = vld [vmem:[%s3 + $0x8] sm:$0xf]
    %v151 = vld [vmem:[%s3 + $0xc] sm:$0xf]
    %v152 = vld [vmem:[%s3 + $0x10] sm:$0xf]
    %v153 = vld [vmem:[%s3 + $0x14] sm:$0xf]
    %v154 = vld [vmem:[%s3 + $0x18] sm:$0xf]
    %v155 = vld [vmem:[%s3 + $0x1c] sm:$0xf]
    %v156 = vld [vmem:[%s3 + $0x20] sm:$0xf]
    %v157 = vld [vmem:[%s3 + $0x24] sm:$0xf]
    %v158 = vld [vmem:[%s3 + $0x28] sm:$0xf]
    %v159 = vld [vmem:[%s3 + $0x2c] sm:$0xf]
    %v160 = vld [vmem:[%s3 + $0x30] sm:$0xf]
    %v161 = vld [vmem:[%s3 + $0x34] sm:$0xf]
    %v162 = vld [vmem:[%s3 + $0x38] sm:$0xf]
    %v163 = vld [vmem:[%s3 + $0x3c] sm:$0xf]
    %v164 = vld [vmem:[%s4] sm:$0x1]
    %v166 = vlaneseq
    %v167 = vshrl.u32 %v166, 7
    %v168 = vsub.s32 0, %v167
    %v169 = vrot.slane %v164, %v168
    %v187 = vunpack.c.l.b16 %v148
    %v188 = vunpack.c.l.b16 %v149
    %v189 = vunpack.c.l.b16 %v150
    %v190 = vunpack.c.l.b16 %v151
    %v191 = vunpack.c.l.b16 %v152
    %v192 = vunpack.c.l.b16 %v153
    %v193 = vunpack.c.l.b16 %v154
    %v194 = vunpack.c.l.b16 %v155
    %v195 = vunpack.c.l.b16 %v156
    %v196 = vunpack.c.l.b16 %v157
    %v197 = vunpack.c.l.b16 %v158
    %v198 = vunpack.c.l.b16 %v159
    %v199 = vunpack.c.l.b16 %v160
    %v200 = vunpack.c.l.b16 %v161
    %v201 = vunpack.c.l.b16 %v162
    %v202 = vunpack.c.l.b16 %v163
    %v203 = vpack.c.b16 %v188, %v187
    %v204 = vpack.c.b16 %v190, %v189
    %v205 = vpack.c.b16 %v192, %v191
    %v206 = vpack.c.b16 %v194, %v193
    %v207 = vpack.c.b16 %v196, %v195
    %v208 = vpack.c.b16 %v198, %v197
    %v209 = vpack.c.b16 %v200, %v199
    %v210 = vpack.c.b16 %v202, %v201
    %219 = vmatprep.subr.bf16.mxu0 0
    %220 = vmatpush1.bf16.msra.mxu0 %v203
    %221 = vmatprep.subr.bf16.mxu0 0
    %222 = vmatpush1.bf16.msra.mxu0 %v204
    %223 = vmatprep.subr.bf16.mxu0 0
    %224 = vmatpush1.bf16.msra.mxu0 %v205
    %225 = vmatprep.subr.bf16.mxu0 0
    %226 = vmatpush1.bf16.msra.mxu0 %v206
    %227 = vmatprep.subr.bf16.mxu0 0
    %228 = vmatpush1.bf16.msra.mxu0 %v207
    %229 = vmatprep.subr.bf16.mxu0 0
    %230 = vmatpush1.bf16.msra.mxu0 %v208
    %231 = vmatprep.subr.bf16.mxu0 0
    %232 = vmatpush1.bf16.msra.mxu0 %v209
    %233 = vmatprep.subr.bf16.mxu0 0
    %234 = vmatpush1.bf16.msra.mxu0 %v210
    %235 = vmatprep.subr.bf16.mxu0 0
    %236 = vmatpush1.bf16.msra.mxu0 0
    %237 = vmatprep.subr.bf16.mxu0 0
    %238 = vmatpush1.bf16.msra.mxu0 0
    %239 = vmatprep.subr.bf16.mxu0 0
    %240 = vmatpush1.bf16.msra.mxu0 0
    %241 = vmatprep.subr.bf16.mxu0 0
    %242 = vmatpush1.bf16.msra.mxu0 0
    %243 = vmatprep.subr.bf16.mxu0 0
    %244 = vmatpush1.bf16.msra.mxu0 0
    %245 = vmatprep.subr.bf16.mxu0 0
    %246 = vmatpush1.bf16.msra.mxu0 0
    %247 = vmatprep.subr.bf16.mxu0 0
    %248 = vmatpush1.bf16.msra.mxu0 0
    %249 = vmatprep.subr.bf16.mxu0 0
    %250 = vmatpush1.bf16.msra.mxu0 0
    %251 = vmatprep.mubr.bf16.mxu0 0
    %252 = vmatmul.mubr.bf16.gmra.mrb[0].mxu0 %v147
    %v253 = vpop.f32.mrb[0].mxu0
    %v254 = vadd.f32 %v169, %v253
    %v255 = vpop.f32.mrb[0].mxu0
    %v256 = vpop.f32.mrb[0].mxu0
    %v257 = vpop.f32.mrb[0].mxu0
    %258 = vdwg.mxu0
    %259 = vst [vmem:[%s5] sm:$0xff] %v254
  $region29: #{mlp_forecast.1} parent=0 // pred_fallthru
    _
  // Predicated region
  $region30: #{mlp_forecast.1} parent=0 // pred_check
    _
  $region31: #{mlp_forecast.1} parent=0 // pred_check_branch
    %261 = sbr.rel (0) target = $region33
  $region32: #{mlp_forecast.1} parent=0 // pred_region
    _
  $region33: #{mlp_forecast.1} parent=0 // pred_fallthru
    _
  // Predicated region
  $region34: #{mlp_forecast.1} parent=0 // pred_check
    _
  $region35: #{mlp_forecast.1} parent=0 // pred_check_branch
    %263 = sbr.rel (0) target = $region37
  $region36: #{mlp_forecast.1} parent=0 // pred_region
    _
  $region37: #{mlp_forecast.1} parent=0 // pred_fallthru
    _

</llo_original>
